<compile_context>
chip_gen: v5e
topology: v5e:2x2
jax: 0.10.0
libtpu: 0.0.40
codegen_flags: <defaults>
</compile_context>

<pallas_src>
import jax
import jax.numpy as jnp
from jax.experimental import pallas as pl
from jax.experimental.pallas import tpu as pltpu


# -----------------------------------------------------------------------------
# Kernel
# -----------------------------------------------------------------------------
def _critic_kernel(state_ref, action_ref,
                   w14_ref, b14_ref,
                   w2_ref, b2_ref, w5_ref, b5_ref,
                   w36_ref, b36_ref,
                   q_ref,
                   sa_ref):
    """Twin-Q MLP. All operands are VMEM-resident blocks.

    Weights are (in, out) bf16; biases are (1, out) f32; accumulation is f32.
    """
    cdt = w14_ref.dtype                        # compute dtype (bf16)
    hdim = w2_ref.shape[0]
    state_dim = state_ref.shape[1]

    # ---- Stage [state | action] into ONE bf16 buffer (single layer-1 K-tile)
    sa_ref[:, :state_dim] = state_ref[...].astype(cdt)
    sa_ref[:, state_dim:] = action_ref[...].astype(cdt)

    # ---- Layer 1, both heads fused: h = relu(sa @ [W1|W4] + [b1|b4]) -------
    h = jnp.dot(sa_ref[...], w14_ref[...],
                preferred_element_type=jnp.float32) + b14_ref[...]
    h = jnp.maximum(h, 0.0)                    # (bb, 2H), f32

    h1 = h[:, :hdim].astype(cdt)               # Q1 head activations
    h2 = h[:, hdim:].astype(cdt)               # Q2 head activations

    # ---- Layer 2, per head --------------------------------------------------
    h1 = jnp.maximum(
        jnp.dot(h1, w2_ref[...], preferred_element_type=jnp.float32)
        + b2_ref[...], 0.0).astype(cdt)
    h2 = jnp.maximum(
        jnp.dot(h2, w5_ref[...], preferred_element_type=jnp.float32)
        + b5_ref[...], 0.0).astype(cdt)

    # ---- Layer 3: block-diagonal (2H, 2) weight, NO concat ------------------
    # w36[:H] = [w3.T | 0], w36[H:] = [0 | w6.T]  ->  q = h1@w36[:H] + h2@w36[H:]
    q = (jnp.dot(h1, w36_ref[0:hdim, :], preferred_element_type=jnp.float32)
         + jnp.dot(h2, w36_ref[hdim:2 * hdim, :],
                   preferred_element_type=jnp.float32)
         + b36_ref[...])                       # (bb, 2)
    q_ref[...] = q.astype(q_ref.dtype)


# -----------------------------------------------------------------------------
# One-time parameter preparation (fusion / transpose / dtype cast)
# -----------------------------------------------------------------------------
def prepare_critic_params(params, state_dim, *, compute_dtype=jnp.bfloat16):
    """Convert PyTorch-layout params (w: (out,in), b: (out,)) into kernel layout.

    Call once at init time, NOT per forward step.
    """
    del state_dim  # no longer needed: layer-1 weight stays fused along K
    p = {k: jnp.asarray(v, jnp.float32) for k, v in params.items()}
    hdim = p["w1"].shape[0]

    # Layer 1 of both heads fused along the output dim: (in_dim, 2H).
    w14 = jnp.concatenate([p["w1"].T, p["w4"].T], axis=1)
    b14 = jnp.concatenate([p["b1"], p["b4"]]).reshape(1, -1)     # (1, 2H)

    # Layer 3 of both heads as one block-diagonal (2H, 2) weight:
    #   col 0 = [w3; 0],  col 1 = [0; w6]
    z = jnp.zeros((hdim, 1), jnp.float32)
    w36 = jnp.concatenate(
        [jnp.concatenate([p["w3"].T, z], axis=0),
         jnp.concatenate([z, p["w6"].T], axis=0)], axis=1)       # (2H, 2)
    b36 = jnp.stack([p["b3"][0], p["b6"][0]]).reshape(1, 2)

    cd = compute_dtype
    return dict(
        w14=w14.astype(cd), b14=b14,
        w2=p["w2"].T.astype(cd), b2=p["b2"].reshape(1, -1),
        w5=p["w5"].T.astype(cd), b5=p["b5"].reshape(1, -1),
        w36=w36.astype(cd), b36=b36,
    )


# -----------------------------------------------------------------------------
# Forward wrapper
# -----------------------------------------------------------------------------
def _round_up(x, m):
    return ((x + m - 1) // m) * m


def critic_forward(state, action, kp, *, block_rows=1024):
    """Pallas equivalent of Critic.forward(state, action) -> (q1, q2)."""
    batch, state_dim = state.shape
    action_dim = action.shape[1]
    in_dim = state_dim + action_dim
    hdim = kp["w2"].shape[0]

    # Batch tile: tiny batches run in one tile; otherwise pick a tile that
    # (a) is a multiple of 8, (b) gives at least 2 grid steps (so v7x's two
    # TensorCores both get work via the "parallel" axis), (c) is capped at
    # block_rows to amortize the ~0.35 us per-grid-step overhead.
    if batch <= 8:
        bb = batch
    else:
        bb = min(block_rows, _round_up(pl.cdiv(batch, 2), 8))
    grid = (pl.cdiv(batch, bb),)

    def rows(i):          # batch-tiled operands
        return (i, 0)

    def pinned(i):        # weights/biases stay resident across the batch grid
        return (0, 0)

    in_specs = [
        pl.BlockSpec((bb, state_dim), rows),
        pl.BlockSpec((bb, action_dim), rows),
        pl.BlockSpec(kp["w14"].shape, pinned),
        pl.BlockSpec(kp["b14"].shape, pinned),
        pl.BlockSpec(kp["w2"].shape, pinned),
        pl.BlockSpec(kp["b2"].shape, pinned),
        pl.BlockSpec(kp["w5"].shape, pinned),
        pl.BlockSpec(kp["b5"].shape, pinned),
        pl.BlockSpec(kp["w36"].shape, pinned),
        pl.BlockSpec(kp["b36"].shape, pinned),
    ]
    out_spec = pl.BlockSpec((bb, 2), rows)

    flops = 2 * batch * (in_dim * 2 * hdim + 2 * hdim * hdim + 2 * hdim * 2)
    weight_bytes = sum(int(v.size) * v.dtype.itemsize for v in kp.values())
    bytes_accessed = (weight_bytes
                      + int(state.size) * state.dtype.itemsize
                      + int(action.size) * action.dtype.itemsize
                      + batch * 2 * 4)
    cost = pl.CostEstimate(flops=flops, transcendentals=0,
                           bytes_accessed=bytes_accessed)

    # Per-tile footprint (h is the dominant term: bb*2H f32) is well under the
    # default scoped-VMEM limit at bb<=1024; only raise it for very large tiles
    # (v5e defaults to 16 MiB scoped VMEM).
    compiler_kwargs = dict(dimension_semantics=("parallel",))
    if bb >= 2048:
        compiler_kwargs["vmem_limit_bytes"] = 32 * 1024 * 1024

    q = pl.pallas_call(
        _critic_kernel,
        out_shape=jax.ShapeDtypeStruct((batch, 2), jnp.float32),
        grid=grid,
        in_specs=in_specs,
        out_specs=out_spec,
        scratch_shapes=[pltpu.VMEM((bb, in_dim), kp["w14"].dtype)],
        compiler_params=pltpu.CompilerParams(**compiler_kwargs),
        cost_estimate=cost,
    )(state, action,
      kp["w14"], kp["b14"],
      kp["w2"], kp["b2"], kp["w5"], kp["b5"],
      kp["w36"], kp["b36"])

    return q[:, 0:1], q[:, 1:2]


# -----------------------------------------------------------------------------
# Init + references (PyTorch semantics) + smoke test
# -----------------------------------------------------------------------------
def init_critic_params(key, state_dim, action_dim, hdim=256):
    """PyTorch-style params: w (out_features, in_features), b (out_features,)."""
    in_dim = state_dim + action_dim
    dims = [(hdim, in_dim), (hdim, hdim), (1, hdim),
            (hdim, in_dim), (hdim, hdim), (1, hdim)]
    params = {}
    keys = jax.random.split(key, 2 * len(dims))
    for i, (out_f, in_f) in enumerate(dims):
        bound = 1.0 / jnp.sqrt(jnp.float32(in_f))
        params[f"w{i + 1}"] = jax.random.uniform(
            keys[2 * i], (out_f, in_f), jnp.float32, -bound, bound)
        params[f"b{i + 1}"] = jax.random.uniform(
            keys[2 * i + 1], (out_f,), jnp.float32, -bound, bound)
    return params


def _reference_forward_f32(state, action, params):
    """Pure-JAX f32 reference reproducing the PyTorch module exactly."""
    sa = jnp.concatenate([state, action], axis=1)

    def lin(x, i):
        return x @ params[f"w{i}"].T + params[f"b{i}"]

    q1 = jax.nn.relu(lin(sa, 1))
    q1 = jax.nn.relu(lin(q1, 2))
    q1 = lin(q1, 3)
    q2 = jax.nn.relu(lin(sa, 4))
    q2 = jax.nn.relu(lin(q2, 5))
    q2 = lin(q2, 6)
    return q1, q2


def _reference_forward_prepared(state, action, kp):
    """Reference mirroring the kernel math with the same prepared bf16 weights."""
    cdt = kp["w14"].dtype
    hdim = kp["w2"].shape[0]
    sa = jnp.concatenate([state, action], axis=1).astype(cdt)
    h = jax.nn.relu(
        jnp.dot(sa, kp["w14"], preferred_element_type=jnp.float32) + kp["b14"])
    h1 = jax.nn.relu(jnp.dot(h[:, :hdim].astype(cdt), kp["w2"],
                             preferred_element_type=jnp.float32)
                     + kp["b2"]).astype(cdt)
    h2 = jax.nn.relu(jnp.dot(h[:, hdim:].astype(cdt), kp["w5"],
                             preferred_element_type=jnp.float32)
                     + kp["b5"]).astype(cdt)
    q = (jnp.dot(h1, kp["w36"][:hdim], preferred_element_type=jnp.float32)
         + jnp.dot(h2, kp["w36"][hdim:], preferred_element_type=jnp.float32)
         + kp["b36"])
    return q[:, 0:1], q[:, 1:2]


if __name__ == "__main__":
    key = jax.random.PRNGKey(0)
    k_params, k_state, k_action = jax.random.split(key, 3)

    batch, state_dim, action_dim, hdim = 2, 8, 4, 32
    params = init_critic_params(k_params, state_dim, action_dim, hdim=hdim)
    kparams = prepare_critic_params(params, state_dim)   # one-time prep

    state = jax.random.normal(k_state, (batch, state_dim), jnp.float32)
    action = jax.random.normal(k_action, (batch, action_dim), jnp.float32)

    q1, q2 = critic_forward(state, action, kparams)
    jax.block_until_ready((q1, q2))
    assert q1.shape == (batch, 1) and q2.shape == (batch, 1)

    # Tight check against a reference using the same bf16 weights / op order.
    q1_p, q2_p = _reference_forward_prepared(state, action, kparams)
    assert jnp.allclose(q1, q1_p, atol=2e-3, rtol=2e-3)
    assert jnp.allclose(q2, q2_p, atol=2e-3, rtol=2e-3)

    # Loose check against the exact f32 PyTorch semantics (bf16 weight quant).
    q1_f, q2_f = _reference_forward_f32(state, action, params)
    assert jnp.allclose(q1, q1_f, atol=5e-2, rtol=5e-2)
    assert jnp.allclose(q2, q2_f, atol=5e-2, rtol=5e-2)

    print("KERNEL_OK")
</pallas_src>

<mosaic_0001>
module attributes {stable_mosaic.version = 11 : i64} {
  func.func @_critic_kernel(%arg0: i32, %arg1: memref<2x8xf32, #tpu.memory_space<vmem>>, %arg2: memref<2x4xf32, #tpu.memory_space<vmem>>, %arg3: memref<12x64xbf16, #tpu.memory_space<vmem>>, %arg4: memref<1x64xf32, #tpu.memory_space<vmem>>, %arg5: memref<32x32xbf16, #tpu.memory_space<vmem>>, %arg6: memref<1x32xf32, #tpu.memory_space<vmem>>, %arg7: memref<32x32xbf16, #tpu.memory_space<vmem>>, %arg8: memref<1x32xf32, #tpu.memory_space<vmem>>, %arg9: memref<64x2xbf16, #tpu.memory_space<vmem>>, %arg10: memref<1x2xf32, #tpu.memory_space<vmem>>, %arg11: memref<2x2xf32, #tpu.memory_space<vmem>>, %arg12: memref<2x12xbf16, #tpu.memory_space<vmem>>) attributes {dimension_semantics = [#tpu.dimension_semantics<parallel>], iteration_bounds = array<i64: 1>, scalar_prefetch = 0 : i64, scratch_operands = 1 : i64, tpu.core_type = #tpu.core_type<tc>, window_params = [{transform_indices = @transform_0, window_bounds = array<i64: 2, 8>}, {transform_indices = @transform_1, window_bounds = array<i64: 2, 4>}, {pipeline_mode = #tpu.pipeline_mode<synchronous>, transform_indices = @transform_2, window_bounds = array<i64: 12, 64>}, {pipeline_mode = #tpu.pipeline_mode<synchronous>, transform_indices = @transform_3, window_bounds = array<i64: 1, 64>}, {pipeline_mode = #tpu.pipeline_mode<synchronous>, transform_indices = @transform_4, window_bounds = array<i64: 32, 32>}, {pipeline_mode = #tpu.pipeline_mode<synchronous>, transform_indices = @transform_5, window_bounds = array<i64: 1, 32>}, {pipeline_mode = #tpu.pipeline_mode<synchronous>, transform_indices = @transform_6, window_bounds = array<i64: 32, 32>}, {pipeline_mode = #tpu.pipeline_mode<synchronous>, transform_indices = @transform_7, window_bounds = array<i64: 1, 32>}, {pipeline_mode = #tpu.pipeline_mode<synchronous>, transform_indices = @transform_8, window_bounds = array<i64: 64, 2>}, {pipeline_mode = #tpu.pipeline_mode<synchronous>, transform_indices = @transform_9, window_bounds = array<i64: 1, 2>}, {transform_indices = @transform_10, window_bounds = array<i64: 2, 2>}]} {
    %c0 = arith.constant 0 : index
    %c0_0 = arith.constant 0 : index
    %0 = vector.load %arg1[%c0, %c0_0] : memref<2x8xf32, #tpu.memory_space<vmem>>, vector<2x8xf32>
    %1 = arith.truncf %0 : vector<2x8xf32> to vector<2x8xbf16>
    %c0_1 = arith.constant 0 : index
    %c0_2 = arith.constant 0 : index
    %2 = vector.load %arg12[%c0_1, %c0_2] : memref<2x12xbf16, #tpu.memory_space<vmem>>, vector<2x8xbf16>
    tpu.vector_store %arg12[%c0_1, %c0_2], %1 {strides = array<i32>} : memref<2x12xbf16, #tpu.memory_space<vmem>>, vector<2x8xbf16>,
    %c0_3 = arith.constant 0 : index
    %c0_4 = arith.constant 0 : index
    %3 = vector.load %arg2[%c0_3, %c0_4] : memref<2x4xf32, #tpu.memory_space<vmem>>, vector<2x4xf32>
    %4 = arith.truncf %3 : vector<2x4xf32> to vector<2x4xbf16>
    %c0_5 = arith.constant 0 : index
    %c8 = arith.constant 8 : index
    %5 = vector.load %arg12[%c0_5, %c8] : memref<2x12xbf16, #tpu.memory_space<vmem>>, vector<2x4xbf16>
    tpu.vector_store %arg12[%c0_5, %c8], %4 {strides = array<i32>} : memref<2x12xbf16, #tpu.memory_space<vmem>>, vector<2x4xbf16>,
    %c0_6 = arith.constant 0 : index
    %c0_7 = arith.constant 0 : index
    %6 = vector.load %arg12[%c0_6, %c0_7] : memref<2x12xbf16, #tpu.memory_space<vmem>>, vector<2x12xbf16>
    %c0_8 = arith.constant 0 : index
    %c0_9 = arith.constant 0 : index
    %7 = vector.load %arg3[%c0_8, %c0_9] : memref<12x64xbf16, #tpu.memory_space<vmem>>, vector<12x64xbf16>
    %cst = arith.constant dense<0.000000e+00> : vector<2x64xf32>
    %8 = tpu.matmul %6, %7, %cst {dimension_numbers = #tpu.dot_dimension_numbers<[1], [0], [0], [1], [0, 0, 1, 1], [], []>} : vector<2x12xbf16>, vector<12x64xbf16>, vector<2x64xf32> -> vector<2x64xf32>
    %c0_10 = arith.constant 0 : index
    %c0_11 = arith.constant 0 : index
    %9 = vector.load %arg4[%c0_10, %c0_11] : memref<1x64xf32, #tpu.memory_space<vmem>>, vector<1x64xf32>
    %10 = vector.broadcast %9 : vector<1x64xf32> to vector<2x64xf32>
    %11 = arith.addf %8, %10 : vector<2x64xf32>
    %cst_12 = arith.constant 0.000000e+00 : f32
    %12 = vector.broadcast %cst_12 : f32 to vector<2x64xf32>
    %13 = arith.maximumf %11, %12 : vector<2x64xf32>
    %14 = vector.extract_strided_slice %13 {offsets = [0, 0], sizes = [2, 32], strides = [1, 1]} : vector<2x64xf32> to vector<2x32xf32>
    %15 = arith.truncf %14 : vector<2x32xf32> to vector<2x32xbf16>
    %16 = vector.extract_strided_slice %13 {offsets = [0, 32], sizes = [2, 32], strides = [1, 1]} : vector<2x64xf32> to vector<2x32xf32>
    %17 = arith.truncf %16 : vector<2x32xf32> to vector<2x32xbf16>
    %c0_13 = arith.constant 0 : index
    %c0_14 = arith.constant 0 : index
    %18 = vector.load %arg5[%c0_13, %c0_14] : memref<32x32xbf16, #tpu.memory_space<vmem>>, vector<32x32xbf16>
    %cst_15 = arith.constant dense<0.000000e+00> : vector<2x32xf32>
    %19 = tpu.matmul %15, %18, %cst_15 {dimension_numbers = #tpu.dot_dimension_numbers<[1], [0], [0], [1], [0, 0, 1, 1], [], []>} : vector<2x32xbf16>, vector<32x32xbf16>, vector<2x32xf32> -> vector<2x32xf32>
    %c0_16 = arith.constant 0 : index
    %c0_17 = arith.constant 0 : index
    %20 = vector.load %arg6[%c0_16, %c0_17] : memref<1x32xf32, #tpu.memory_space<vmem>>, vector<1x32xf32>
    %21 = vector.broadcast %20 : vector<1x32xf32> to vector<2x32xf32>
    %22 = arith.addf %19, %21 : vector<2x32xf32>
    %cst_18 = arith.constant 0.000000e+00 : f32
    %23 = vector.broadcast %cst_18 : f32 to vector<2x32xf32>
    %24 = arith.maximumf %22, %23 : vector<2x32xf32>
    %25 = arith.truncf %24 : vector<2x32xf32> to vector<2x32xbf16>
    %c0_19 = arith.constant 0 : index
    %c0_20 = arith.constant 0 : index
    %26 = vector.load %arg7[%c0_19, %c0_20] : memref<32x32xbf16, #tpu.memory_space<vmem>>, vector<32x32xbf16>
    %cst_21 = arith.constant dense<0.000000e+00> : vector<2x32xf32>
    %27 = tpu.matmul %17, %26, %cst_21 {dimension_numbers = #tpu.dot_dimension_numbers<[1], [0], [0], [1], [0, 0, 1, 1], [], []>} : vector<2x32xbf16>, vector<32x32xbf16>, vector<2x32xf32> -> vector<2x32xf32>
    %c0_22 = arith.constant 0 : index
    %c0_23 = arith.constant 0 : index
    %28 = vector.load %arg8[%c0_22, %c0_23] : memref<1x32xf32, #tpu.memory_space<vmem>>, vector<1x32xf32>
    %29 = vector.broadcast %28 : vector<1x32xf32> to vector<2x32xf32>
    %30 = arith.addf %27, %29 : vector<2x32xf32>
    %cst_24 = arith.constant 0.000000e+00 : f32
    %31 = vector.broadcast %cst_24 : f32 to vector<2x32xf32>
    %32 = arith.maximumf %30, %31 : vector<2x32xf32>
    %33 = arith.truncf %32 : vector<2x32xf32> to vector<2x32xbf16>
    %c0_25 = arith.constant 0 : index
    %c0_26 = arith.constant 0 : index
    %34 = vector.load %arg9[%c0_25, %c0_26] : memref<64x2xbf16, #tpu.memory_space<vmem>>, vector<32x2xbf16>
    %cst_27 = arith.constant dense<0.000000e+00> : vector<2x2xf32>
    %35 = tpu.matmul %25, %34, %cst_27 {dimension_numbers = #tpu.dot_dimension_numbers<[1], [0], [0], [1], [0, 0, 1, 1], [], []>} : vector<2x32xbf16>, vector<32x2xbf16>, vector<2x2xf32> -> vector<2x2xf32>
    %c32 = arith.constant 32 : index
    %c0_28 = arith.constant 0 : index
    %36 = vector.load %arg9[%c32, %c0_28] : memref<64x2xbf16, #tpu.memory_space<vmem>>, vector<32x2xbf16>
    %cst_29 = arith.constant dense<0.000000e+00> : vector<2x2xf32>
    %37 = tpu.matmul %33, %36, %cst_29 {dimension_numbers = #tpu.dot_dimension_numbers<[1], [0], [0], [1], [0, 0, 1, 1], [], []>} : vector<2x32xbf16>, vector<32x2xbf16>, vector<2x2xf32> -> vector<2x2xf32>
    %38 = arith.addf %35, %37 : vector<2x2xf32>
    %c0_30 = arith.constant 0 : index
    %c0_31 = arith.constant 0 : index
    %39 = vector.load %arg10[%c0_30, %c0_31] : memref<1x2xf32, #tpu.memory_space<vmem>>, vector<1x2xf32>
    %40 = vector.broadcast %39 : vector<1x2xf32> to vector<2x2xf32>
    %41 = arith.addf %38, %40 : vector<2x2xf32>
    %c0_32 = arith.constant 0 : index
    %c0_33 = arith.constant 0 : index
    %42 = vector.load %arg11[%c0_32, %c0_33] : memref<2x2xf32, #tpu.memory_space<vmem>>, vector<2x2xf32>
    tpu.vector_store %arg11[%c0_32, %c0_33], %41 {strides = array<i32>} : memref<2x2xf32, #tpu.memory_space<vmem>>, vector<2x2xf32>,
    return
  }
  func.func @transform_0(%arg0: i32) -> (i32, i32) {
    %c0_i32 = arith.constant 0 : i32
    %c0_i32_0 = arith.constant 0 : i32
    return %arg0, %c0_i32 : i32, i32
  }
  func.func @transform_1(%arg0: i32) -> (i32, i32) {
    %c0_i32 = arith.constant 0 : i32
    %c0_i32_0 = arith.constant 0 : i32
    return %arg0, %c0_i32 : i32, i32
  }
  func.func @transform_2(%arg0: i32) -> (i32, i32) {
    %c0_i32 = arith.constant 0 : i32
    %c0_i32_0 = arith.constant 0 : i32
    %c0_i32_1 = arith.constant 0 : i32
    return %c0_i32, %c0_i32_0 : i32, i32
  }
  func.func @transform_3(%arg0: i32) -> (i32, i32) {
    %c0_i32 = arith.constant 0 : i32
    %c0_i32_0 = arith.constant 0 : i32
    %c0_i32_1 = arith.constant 0 : i32
    return %c0_i32, %c0_i32_0 : i32, i32
  }
  func.func @transform_4(%arg0: i32) -> (i32, i32) {
    %c0_i32 = arith.constant 0 : i32
    %c0_i32_0 = arith.constant 0 : i32
    %c0_i32_1 = arith.constant 0 : i32
    return %c0_i32, %c0_i32_0 : i32, i32
  }
  func.func @transform_5(%arg0: i32) -> (i32, i32) {
    %c0_i32 = arith.constant 0 : i32
    %c0_i32_0 = arith.constant 0 : i32
    %c0_i32_1 = arith.constant 0 : i32
    return %c0_i32, %c0_i32_0 : i32, i32
  }
  func.func @transform_6(%arg0: i32) -> (i32, i32) {
    %c0_i32 = arith.constant 0 : i32
    %c0_i32_0 = arith.constant 0 : i32
    %c0_i32_1 = arith.constant 0 : i32
    return %c0_i32, %c0_i32_0 : i32, i32
  }
  func.func @transform_7(%arg0: i32) -> (i32, i32) {
    %c0_i32 = arith.constant 0 : i32
    %c0_i32_0 = arith.constant 0 : i32
    %c0_i32_1 = arith.constant 0 : i32
    return %c0_i32, %c0_i32_0 : i32, i32
  }
  func.func @transform_8(%arg0: i32) -> (i32, i32) {
    %c0_i32 = arith.constant 0 : i32
    %c0_i32_0 = arith.constant 0 : i32
    %c0_i32_1 = arith.constant 0 : i32
    return %c0_i32, %c0_i32_0 : i32, i32
  }
  func.func @transform_9(%arg0: i32) -> (i32, i32) {
    %c0_i32 = arith.constant 0 : i32
    %c0_i32_0 = arith.constant 0 : i32
    %c0_i32_1 = arith.constant 0 : i32
    return %c0_i32, %c0_i32_0 : i32, i32
  }
  func.func @transform_10(%arg0: i32) -> (i32, i32) {
    %c0_i32 = arith.constant 0 : i32
    %c0_i32_0 = arith.constant 0 : i32
    return %arg0, %c0_i32 : i32, i32
  }
}

</mosaic_0001>

<llo_original>
// kernel: tpu_custom_call.1
$region0: #{tpu_custom_call.1}
  #allocation0 [shape = 'u32[]', space=smem, size = 0x4, offset = 0x4, fixed_abs, tag = 'smem constant byte address 0x4 - core index']
  #allocation1 [shape = 'u32[72,128]{1,0:T(1,128)}', space=vmem, size = 0x9000, scoped, tag = 'internal scratch']
  #allocation2 [shape = 'bf16[2,12]{1,0:T(2,128)(2,1)}', space=vmem, size = 0x200, scoped, tag = 'scratch operand']
  %s0 = inlined_call_operand.hbm [shape: f32[2,8], index: 0, kind: input, shape index: {}]
  %s1 = inlined_call_operand.hbm [shape: f32[2,4], index: 1, kind: input, shape index: {}]
  %s2 = inlined_call_operand.hbm [shape: bf16[12,64], index: 2, kind: input, shape index: {}]
  %s3 = inlined_call_operand.vmem [shape: f32[1,64], index: 3, kind: input, shape index: {}]
  %s4 = inlined_call_operand.vmem [shape: bf16[32,32], index: 4, kind: input, shape index: {}]
  %s5 = inlined_call_operand.vmem [shape: f32[1,32], index: 5, kind: input, shape index: {}]
  %s6 = inlined_call_operand.vmem [shape: bf16[32,32], index: 6, kind: input, shape index: {}]
  %s7 = inlined_call_operand.vmem [shape: f32[1,32], index: 7, kind: input, shape index: {}]
  %s8 = inlined_call_operand.vmem [shape: bf16[64,2], index: 8, kind: input, shape index: {}]
  %s9 = inlined_call_operand.vmem [shape: f32[1,2], index: 9, kind: input, shape index: {}]
  %s10 = inlined_call_operand.hbm [shape: f32[2,2], index: 10, kind: output, shape index: {}]
  %s11 = sld [smem:[#allocation0]]
  $region62: #{tpu_custom_call.1} parent=0
    _
  %s13 = ssub.s32 1, %s11
  %s14 = scalar_select 0, %s13, %s11
  $region1: #{tpu_custom_call.1} parent=0
    #allocation3 [shape = 'u8[1024]{0}', space=vmem, size = 0x400, scoped, tag = 'input window, operand 0, single buffered']
    #allocation4 [shape = 's32[1]{0}', space=sflag, size = 0x4, scoped, tag = 'scoped memory for tpu_custom_call.1']
    #allocation5 [shape = 's32[1]{0}', space=sflag, size = 0x4, scoped, tag = 'scoped memory for tpu_custom_call.1']
    #allocation6 [shape = 'u8[1024]{0}', space=vmem, size = 0x400, scoped, tag = 'input window, operand 1, single buffered']
    #allocation7 [shape = 's32[1]{0}', space=sflag, size = 0x4, scoped, tag = 'scoped memory for tpu_custom_call.1']
    #allocation8 [shape = 'u8[4096]{0}', space=vmem, size = 0x1000, scoped, tag = 'input window, operand 2, single buffered']
    #allocation9 [shape = 'u8[1024]{0}', space=vmem, size = 0x400, scoped, tag = 'output window, operand 0, single buffered']
    %15 = vsyncpa [#allocation4], 0
    %16 = vsyncpa [#allocation7], 0
    %17 = vsyncpa [#allocation5], 0
    // Predicated region
    $region2: #{tpu_custom_call.1} parent=1 // pred_check
      _
    $region3: #{tpu_custom_call.1} parent=1 // pred_check_branch
      %19 = sbr.rel (0) target = $region5
    $region4: #{tpu_custom_call.1} parent=1 // pred_region
      %21 = vsyncadd [#allocation4], 0
      %s23 = sshll.u32 %s0, 4
      %s24 = int_to_ptr.hbm [resolvable:$true] %s23
      %s25 = sshll.u32 [#allocation3], 4
      %s26 = int_to_ptr.vmem [resolvable:$true] %s25
      %28 = dma.hbm_to_vmem [thread:$0]  %s24, 32, %s26, [#allocation4]
    $region5: #{tpu_custom_call.1} parent=1 // pred_fallthru
      _
    // Predicated region
    $region6: #{tpu_custom_call.1} parent=1 // pred_check
      _
    $region7: #{tpu_custom_call.1} parent=1 // pred_check_branch
      %30 = sbr.rel (0) target = $region9
    $region8: #{tpu_custom_call.1} parent=1 // pred_region
      %32 = vsyncadd [#allocation7], 0
      %s34 = sshll.u32 %s1, 4
      %s35 = int_to_ptr.hbm [resolvable:$true] %s34
      %s36 = sshll.u32 [#allocation6], 4
      %s37 = int_to_ptr.vmem [resolvable:$true] %s36
      %39 = dma.hbm_to_vmem [thread:$0]  %s35, 32, %s37, [#allocation7]
    $region9: #{tpu_custom_call.1} parent=1 // pred_fallthru
      _
    // Predicated region
    $region10: #{tpu_custom_call.1} parent=1 // pred_check
      _
    $region11: #{tpu_custom_call.1} parent=1 // pred_check_branch
      %41 = sbr.rel (0) target = $region13
    $region12: #{tpu_custom_call.1} parent=1 // pred_region
      %43 = vsyncadd [#allocation7], 0
      %s44 = sshll.u32 %s2, 4
      %s45 = int_to_ptr.hbm [resolvable:$true] %s44
      %s46 = sshll.u32 [#allocation8], 4
      %s47 = int_to_ptr.vmem [resolvable:$true] %s46
      %52 = dma.hbm_to_vmem [thread:$0]  %s45, 128, %s47, [#allocation7], 64, 64, 4
    $region13: #{tpu_custom_call.1} parent=1 // pred_fallthru
      _
    // Predicated region
    $region14: #{tpu_custom_call.1} parent=1 // pred_check
      _
    $region15: #{tpu_custom_call.1} parent=1 // pred_check_branch
      %54 = sbr.rel (0) target = $region17
    $region16: #{tpu_custom_call.1} parent=1 // pred_region
      _
    $region17: #{tpu_custom_call.1} parent=1 // pred_fallthru
      _
    // Predicated region
    $region18: #{tpu_custom_call.1} parent=1 // pred_check
      _
    $region19: #{tpu_custom_call.1} parent=1 // pred_check_branch
      %56 = sbr.rel (0) target = $region21
    $region20: #{tpu_custom_call.1} parent=1 // pred_region
      _
    $region21: #{tpu_custom_call.1} parent=1 // pred_fallthru
      _
    // Predicated region
    $region22: #{tpu_custom_call.1} parent=1 // pred_check
      _
    $region23: #{tpu_custom_call.1} parent=1 // pred_check_branch
      %58 = sbr.rel (0) target = $region25
    $region24: #{tpu_custom_call.1} parent=1 // pred_region
      _
    $region25: #{tpu_custom_call.1} parent=1 // pred_fallthru
      _
    // Predicated region
    $region26: #{tpu_custom_call.1} parent=1 // pred_check
      _
    $region27: #{tpu_custom_call.1} parent=1 // pred_check_branch
      %60 = sbr.rel (0) target = $region29
    $region28: #{tpu_custom_call.1} parent=1 // pred_region
      _
    $region29: #{tpu_custom_call.1} parent=1 // pred_fallthru
      _
    // Predicated region
    $region30: #{tpu_custom_call.1} parent=1 // pred_check
      _
    $region31: #{tpu_custom_call.1} parent=1 // pred_check_branch
      %62 = sbr.rel (0) target = $region33
    $region32: #{tpu_custom_call.1} parent=1 // pred_region
      _
    $region33: #{tpu_custom_call.1} parent=1 // pred_fallthru
      _
    // Predicated region
    $region34: #{tpu_custom_call.1} parent=1 // pred_check
      _
    $region35: #{tpu_custom_call.1} parent=1 // pred_check_branch
      %64 = sbr.rel (0) target = $region37
    $region36: #{tpu_custom_call.1} parent=1 // pred_region
      _
    $region37: #{tpu_custom_call.1} parent=1 // pred_fallthru
      _
    // Predicated region
    $region38: #{tpu_custom_call.1} parent=1 // pred_check
      _
    $region39: #{tpu_custom_call.1} parent=1 // pred_check_branch
      %66 = sbr.rel (0) target = $region41
    $region40: #{tpu_custom_call.1} parent=1 // pred_region
      _
    $region41: #{tpu_custom_call.1} parent=1 // pred_fallthru
      _
    // Predicated region
    $region42: #{tpu_custom_call.1} parent=1 // pred_check
      _
    $region43: #{tpu_custom_call.1} parent=1 // pred_check_branch
      %68 = sbr.rel (0) target = $region45
    $region44: #{tpu_custom_call.1} parent=1 // pred_region
      %70 = dma.done [#allocation4], 32
    $region45: #{tpu_custom_call.1} parent=1 // pred_fallthru
      _
    // Predicated region
    $region46: #{tpu_custom_call.1} parent=1 // pred_check
      _
    $region47: #{tpu_custom_call.1} parent=1 // pred_check_branch
      %72 = sbr.rel (0) target = $region49
    $region48: #{tpu_custom_call.1} parent=1 // pred_region
      %74 = dma.done [#allocation7], 32
    $region49: #{tpu_custom_call.1} parent=1 // pred_fallthru
      _
    // Predicated region
    $region50: #{tpu_custom_call.1} parent=1 // pred_check
      _
    $region51: #{tpu_custom_call.1} parent=1 // pred_check_branch
      %76 = sbr.rel (0) target = $region53
    $region52: #{tpu_custom_call.1} parent=1 // pred_region
      %78 = dma.done [#allocation7], 128
    $region53: #{tpu_custom_call.1} parent=1 // pred_fallthru
      _
    %v80 = vld [vmem:[#allocation3] sm:$0x3]
    %v81 = vpack.c.bf16 %v80, %v80
    %vm82 = vcmask 57344
    %83 = vst.msk [vmem:[#allocation2] sm:$0x1] %vm82, %v81
    %v84 = vld [vmem:[#allocation6] sm:$0x3]
    %v85 = vpack.c.bf16 %v84, %v84
    %v87 = vrot.slane %v85, 3
    %vm88 = vcmask 1040384
    %v91 = vsel %vm88, %v85, %v87
    %93 = vrot.lane.b32.xlu0 %v91, 8
    %v94 = vpop.permute.xlu0 %93
    %vm96 = vcmask 90176
    %97 = vst.msk [vmem:[#allocation2] sm:$0x1] %vm96, %v94
    %v98 = vld [vmem:[#allocation2] sm:$0x1]
    %v99 = vld [vmem:[#allocation8] sm:$0xf]
    %v100 = vld [vmem:[#allocation8 + $0x4] sm:$0x3]
    %v101 = vld [vmem:[%s3] sm:$0x1]
    %v103 = vperm.slane %v101, 0
    %v107 = vunpack.c.l.b16 %v99
    %v108 = vunpack.c.l.b16 %v100
    %v109 = vpack.c.b16 %v108, %v107
    %vm110 = vcmask 97280
    %v112 = vsel %vm110, %v98, 0
    %vm114 = vcmask 1045504
    %v116 = vsel %vm114, %v109, 0
    %118 = vmatpush.bf16.msra.mxu0 0
    %119 = vmatpush.bf16.msra.mxu0 0
    %120 = vmatpush.bf16.msra.mxu0 0
    %121 = vmatpush.bf16.msra.mxu0 0
    %122 = vmatpush.bf16.msra.mxu0 0
    %123 = vmatpush.bf16.msra.mxu0 0
    %124 = vmatpush.bf16.msra.mxu0 0
    %125 = vmatpush.bf16.msra.mxu0 %v116
    %126 = vmatmul.bf16.gmra.mxu0 %v112
    %v127 = vpop.f32.mrf.mxu0
    %v128 = vadd.f32 %v103, %v127
    %v129 = vpop.f32.mrf.mxu0
    %130 = vdwg.mxu0
    %v131 = vmax.f32 %v128, 0.0
    %v132 = vpack.c.bf16 %v131, %v131
    %v133 = vld [vmem:[%s4] sm:$0xf]
    %v134 = vld [vmem:[%s4 + $0x4] sm:$0xf]
    %v135 = vld [vmem:[%s4 + $0x8] sm:$0xf]
    %v136 = vld [vmem:[%s4 + $0xc] sm:$0xf]
    %v137 = vld [vmem:[%s5] sm:$0x1]
    %v139 = vperm.slane %v137, 0
    %v145 = vunpack.c.l.b16 %v133
    %v146 = vunpack.c.l.b16 %v134
    %v147 = vunpack.c.l.b16 %v135
    %v148 = vunpack.c.l.b16 %v136
    %v149 = vpack.c.b16 %v146, %v145
    %v150 = vpack.c.b16 %v148, %v147
    %vm153 = vcmask 261120
    %v155 = vsel %vm153, %v132, 0
    %157 = vmatpush.bf16.msra.mxu0 0
    %158 = vmatpush.bf16.msra.mxu0 0
    %159 = vmatpush.bf16.msra.mxu0 0
    %160 = vmatpush.bf16.msra.mxu0 0
    %161 = vmatpush.bf16.msra.mxu0 0
    %162 = vmatpush.bf16.msra.mxu0 0
    %163 = vmatpush.bf16.msra.mxu0 %v150
    %164 = vmatpush.bf16.msra.mxu0 %v149
    %165 = vmatmul.bf16.gmra.mxu0 %v155
    %v166 = vpop.f32.mrf.mxu0
    %v167 = vadd.f32 %v139, %v166
    %v168 = vpop.f32.mrf.mxu0
    %169 = vdwg.mxu0
    %v170 = vmax.f32 %v167, 0.0
    %v171 = vpack.c.bf16 %v170, %v170
    %v172 = vld [vmem:[%s6] sm:$0xf]
    %v173 = vld [vmem:[%s6 + $0x4] sm:$0xf]
    %v174 = vld [vmem:[%s6 + $0x8] sm:$0xf]
    %v175 = vld [vmem:[%s6 + $0xc] sm:$0xf]
    %v176 = vld [vmem:[%s7] sm:$0x1]
    %v178 = vperm.slane %v176, 0
    %181 = vrot.lane.b32.xlu0 %v132, 96
    %v182 = vpop.permute.xlu0 %181
    %v187 = vunpack.c.l.b16 %v172
    %v188 = vunpack.c.l.b16 %v173
    %v189 = vunpack.c.l.b16 %v174
    %v190 = vunpack.c.l.b16 %v175
    %v191 = vpack.c.b16 %v188, %v187
    %v192 = vpack.c.b16 %v190, %v189
    %v196 = vsel %vm153, %v182, 0
    %198 = vmatpush.bf16.msra.mxu0 0
    %199 = vmatpush.bf16.msra.mxu0 0
    %200 = vmatpush.bf16.msra.mxu0 0
    %201 = vmatpush.bf16.msra.mxu0 0
    %202 = vmatpush.bf16.msra.mxu0 0
    %203 = vmatpush.bf16.msra.mxu0 0
    %204 = vmatpush.bf16.msra.mxu0 %v192
    %205 = vmatpush.bf16.msra.mxu0 %v191
    %206 = vmatmul.bf16.gmra.mxu0 %v196
    %v207 = vpop.f32.mrf.mxu0
    %v208 = vadd.f32 %v178, %v207
    %v209 = vpop.f32.mrf.mxu0
    %210 = vdwg.mxu0
    %v211 = vmax.f32 %v208, 0.0
    %v212 = vpack.c.bf16 %v211, %v211
    %v213 = vld [vmem:[%s8] sm:$0xf]
    %v214 = vld [vmem:[%s8 + $0x4] sm:$0xf]
    %v215 = vld [vmem:[%s8 + $0x8] sm:$0xf]
    %v216 = vld [vmem:[%s8 + $0xc] sm:$0xf]
    %v217 = vld [vmem:[%s8 + $0x10] sm:$0xf]
    %v218 = vld [vmem:[%s8 + $0x14] sm:$0xf]
    %v219 = vld [vmem:[%s8 + $0x18] sm:$0xf]
    %v220 = vld [vmem:[%s8 + $0x1c] sm:$0xf]
    %v225 = vunpack.c.l.b16 %v217
    %v226 = vunpack.c.l.b16 %v218
    %v227 = vunpack.c.l.b16 %v219
    %v228 = vunpack.c.l.b16 %v220
    %v229 = vpack.c.b16 %v226, %v225
    %v230 = vpack.c.b16 %v228, %v227
    %v234 = vsel %vm153, %v212, 0
    %236 = vmatpush.bf16.msra.mxu0 0
    %237 = vmatpush.bf16.msra.mxu0 0
    %238 = vmatpush.bf16.msra.mxu0 0
    %239 = vmatpush.bf16.msra.mxu0 0
    %240 = vmatpush.bf16.msra.mxu0 0
    %241 = vmatpush.bf16.msra.mxu0 0
    %242 = vmatpush.bf16.msra.mxu0 %v230
    %243 = vmatpush.bf16.msra.mxu0 %v229
    %244 = vmatmul.bf16.gmra.mxu0 %v234
    %v245 = vpop.f32.mrf.mxu0
    %v246 = vadd.f32 0.0, %v245
    %v247 = vpop.f32.mrf.mxu0
    %248 = vdwg.mxu0
    %v253 = vunpack.c.l.b16 %v213
    %v254 = vunpack.c.l.b16 %v214
    %v255 = vunpack.c.l.b16 %v215
    %v256 = vunpack.c.l.b16 %v216
    %v257 = vpack.c.b16 %v254, %v253
    %v258 = vpack.c.b16 %v256, %v255
    %v262 = vsel %vm153, %v171, 0
    %264 = vmatpush.bf16.msra.mxu0 0
    %265 = vmatpush.bf16.msra.mxu0 0
    %266 = vmatpush.bf16.msra.mxu0 0
    %267 = vmatpush.bf16.msra.mxu0 0
    %268 = vmatpush.bf16.msra.mxu0 0
    %269 = vmatpush.bf16.msra.mxu0 0
    %270 = vmatpush.bf16.msra.mxu0 %v258
    %271 = vmatpush.bf16.msra.mxu0 %v257
    %272 = vmatmul.bf16.gmra.mxu0 %v262
    %v273 = vpop.f32.mrf.mxu0
    %v274 = vadd.f32 %v246, %v273
    %v275 = vpop.f32.mrf.mxu0
    %276 = vdwg.mxu0
    %v277 = vld [vmem:[%s9] sm:$0x1]
    %v279 = vperm.slane %v277, 0
    %v281 = vadd.f32 %v274, %v279
    %vm282 = vcmask 9216
    %283 = vst.msk [vmem:[#allocation9] sm:$0x3] %vm282, %v281
    // Predicated region
    $region54: #{tpu_custom_call.1} parent=1 // pred_check
      _
    $region55: #{tpu_custom_call.1} parent=1 // pred_check_branch
      %285 = sbr.rel (0) target = $region57
    $region56: #{tpu_custom_call.1} parent=1 // pred_region
      %287 = vsyncadd [#allocation5], 0
      %s289 = sshll.u32 [#allocation9], 4
      %s290 = int_to_ptr.vmem [resolvable:$true] %s289
      %s291 = sshll.u32 %s10, 4
      %s292 = int_to_ptr.hbm [resolvable:$true] %s291
      %294 = dma.vmem_to_hbm [thread:$0]  %s290, 32, %s292, [#allocation5]
    $region57: #{tpu_custom_call.1} parent=1 // pred_fallthru
      _
    // Predicated region
    $region58: #{tpu_custom_call.1} parent=1 // pred_check
      _
    $region59: #{tpu_custom_call.1} parent=1 // pred_check_branch
      %296 = sbr.rel (0) target = $region61
    $region60: #{tpu_custom_call.1} parent=1 // pred_region
      %298 = dma.done [#allocation5], 32
    $region61: #{tpu_custom_call.1} parent=1 // pred_fallthru
      _
    %299 = vsyncpa [#allocation4], 1
    %300 = vsyncpa [#allocation7], 1
    %301 = vsyncpa [#allocation5], 1

</llo_original>
